<compile_context>
chip_gen: v7x
topology: tpu7x:2x2x1
jax: 0.10.0
libtpu: 0.0.40
codegen_flags: <defaults>
</compile_context>

<pallas_src>
import functools

import jax
import jax.numpy as jnp
from jax.experimental import pallas as pl
from jax.experimental.pallas import tpu as pltpu


def _round_up(a, b):
    return ((a + b - 1) // b) * b


def quantum_kernel(x_ref, coef_ref, out_ref, *, n_layers, n_qubits, q_pad):
    """x_ref: (q_pad, TILE_M).  coef_ref: (L, 4, q_pad, 1) = [ca, sa, se, ce]."""
    x = x_ref[...]                                        # (q_pad, TILE_M) f32
    for layer in range(n_layers):                         # static unroll
        ca = coef_ref[layer, 0, :, :]                     # (q_pad, 1)
        sa = coef_ref[layer, 1, :, :]
        se = coef_ref[layer, 2, :, :]
        ce = coef_ref[layer, 3, :, :]
        # rotation: sum_k sin(x + r_k) = sin(x)*Σcos(r_k) + cos(x)*Σsin(r_k)
        x = jnp.sin(x) * ca + jnp.cos(x) * sa
        # circular shift along the qubit (sublane) axis == torch.roll(x, 1, dims=-1)
        xs = pltpu.roll(x, shift=1, axis=0)
        if q_pad != n_qubits:
            # wrap-around fix: row 0 must receive row n_qubits-1, not q_pad-1
            wrap = pltpu.roll(x, shift=q_pad - n_qubits + 1, axis=0)
            row = jax.lax.broadcasted_iota(jnp.int32, x.shape, 0)
            xs = jnp.where(row == 0, wrap, xs)
        # entanglement mix; se/ce carry trailing zeros implementing F.pad(...,(0,1))
        x = x * se + xs * ce
    out_ref[...] = x


def quantum_layer_forward(x, rotation, entanglement, *, tile_m=1024):
    """x: (B, S, D) or (S, D) f32.  rotation: (L, Q, 3).  entanglement: (L, Q-1)."""
    if x.ndim == 2:                                       # matches PyTorch unsqueeze(0)
        x = x[None]
    n_layers, n_qubits, _ = rotation.shape
    B, S, D = x.shape

    # match the PyTorch forward: pad or truncate the feature dim to n_qubits
    if D < n_qubits:
        x = jnp.pad(x, ((0, 0), (0, 0), (0, n_qubits - D)))
    elif D > n_qubits:
        x = x[:, :, :n_qubits]

    q_pad = _round_up(n_qubits, 8)                        # sublane alignment
    M = B * S
    tm = tile_m if M >= tile_m else _round_up(M, 128)
    m_pad = _round_up(M, tm)

    # (B, S, Q) -> lane-dense (q_pad, m_pad) slab (wrapper-side layout plumbing)
    xt = x.reshape(M, n_qubits).T.astype(jnp.float32)
    xt = jnp.pad(xt, ((0, q_pad - n_qubits), (0, m_pad - M)))

    # host-side folding of per-layer parameters into per-qubit coefficients (f32)
    rotation = rotation.astype(jnp.float32)
    entanglement = entanglement.astype(jnp.float32)
    ca = jnp.sum(jnp.cos(rotation), axis=-1)              # (L, Q)
    sa = jnp.sum(jnp.sin(rotation), axis=-1)              # (L, Q)
    se = jnp.sin(entanglement)                            # (L, Q-1)
    ce = jnp.cos(entanglement)                            # (L, Q-1)
    ca = jnp.pad(ca, ((0, 0), (0, q_pad - n_qubits)))              # zeros keep pad rows 0
    sa = jnp.pad(sa, ((0, 0), (0, q_pad - n_qubits)))
    se = jnp.pad(se, ((0, 0), (0, q_pad - (n_qubits - 1))))        # zero at Q-1 == F.pad
    ce = jnp.pad(ce, ((0, 0), (0, q_pad - (n_qubits - 1))))
    coef = jnp.stack([ca, sa, se, ce], axis=1)[..., None]          # (L, 4, q_pad, 1)

    kernel = functools.partial(
        quantum_kernel, n_layers=n_layers, n_qubits=n_qubits, q_pad=q_pad)

    out = pl.pallas_call(
        kernel,
        out_shape=jax.ShapeDtypeStruct((q_pad, m_pad), jnp.float32),
        grid=(m_pad // tm,),
        in_specs=[
            pl.BlockSpec((q_pad, tm), lambda m: (0, m)),
            pl.BlockSpec(coef.shape, lambda m: (0, 0, 0, 0)),      # resident weights
        ],
        out_specs=pl.BlockSpec((q_pad, tm), lambda m: (0, m)),
        compiler_params=pltpu.CompilerParams(dimension_semantics=("parallel",)),
    )(xt, coef)

    return out[:n_qubits, :M].T.reshape(B, S, n_qubits)


# ----------------------- pure-JAX reference (PyTorch semantics) ---------------
def quantum_layer_ref(x, rotation, entanglement):
    if x.ndim == 2:
        x = x[None]
    n_layers, n_qubits, _ = rotation.shape
    B, S, D = x.shape
    if D < n_qubits:
        x = jnp.pad(x, ((0, 0), (0, 0), (0, n_qubits - D)))
    elif D > n_qubits:
        x = x[:, :, :n_qubits]
    for layer in range(n_layers):
        rot = rotation[layer]                              # (Q, 3)
        ent = entanglement[layer]                          # (Q-1,)
        x = jnp.sin(x[..., None] + rot).sum(-1)            # (B, S, Q)
        xs = jnp.roll(x, 1, axis=-1)
        x = x[..., :-1] * jnp.sin(ent) + xs[..., :-1] * jnp.cos(ent)
        x = jnp.pad(x, ((0, 0), (0, 0), (0, 1)))
    return x


if __name__ == "__main__":
    key = jax.random.PRNGKey(0)

    # --- test 1: n_qubits == q_pad (no wrap fix), input_dim > n_qubits ---------
    k_x, k_rot, k_ent, key = jax.random.split(key, 4)
    batch, seq_len, input_dim = 2, 128, 16
    n_qubits, n_layers = 8, 3
    x = jax.random.normal(k_x, (batch, seq_len, input_dim), jnp.float32)
    rotation = jax.random.normal(k_rot, (n_layers, n_qubits, 3), jnp.float32)
    entanglement = jax.random.normal(k_ent, (n_layers, n_qubits - 1), jnp.float32)

    out = quantum_layer_forward(x, rotation, entanglement, tile_m=128)
    out = jax.block_until_ready(out)
    ref = quantum_layer_ref(x, rotation, entanglement)
    err = float(jnp.max(jnp.abs(out - ref)))
    assert out.shape == (batch, seq_len, n_qubits), out.shape
    assert err < 2e-3, f"test1 max abs error {err}"

    # --- test 2: n_qubits < q_pad (wrap fix path), input_dim < n_qubits --------
    k_x2, k_rot2, k_ent2, key = jax.random.split(key, 4)
    batch2, seq_len2, input_dim2 = 1, 64, 4
    n_qubits2, n_layers2 = 6, 2
    x2 = jax.random.normal(k_x2, (batch2, seq_len2, input_dim2), jnp.float32)
    rotation2 = jax.random.normal(k_rot2, (n_layers2, n_qubits2, 3), jnp.float32)
    entanglement2 = jax.random.normal(k_ent2, (n_layers2, n_qubits2 - 1), jnp.float32)

    out2 = quantum_layer_forward(x2, rotation2, entanglement2)
    out2 = jax.block_until_ready(out2)
    ref2 = quantum_layer_ref(x2, rotation2, entanglement2)
    err2 = float(jnp.max(jnp.abs(out2 - ref2)))
    assert out2.shape == (batch2, seq_len2, n_qubits2), out2.shape
    assert err2 < 2e-3, f"test2 max abs error {err2}"

    print("KERNEL_OK")
</pallas_src>

<mosaic_0001>
module attributes {stable_mosaic.version = 11 : i64} {
  func.func @quantum_kernel(%arg0: i32, %arg1: memref<8x128xf32, #tpu.memory_space<vmem>>, %arg2: memref<3x4x8x1xf32, #tpu.memory_space<vmem>>, %arg3: memref<8x128xf32, #tpu.memory_space<vmem>>) attributes {dimension_semantics = [#tpu.dimension_semantics<parallel>], iteration_bounds = array<i64: 2>, scalar_prefetch = 0 : i64, scratch_operands = 0 : i64, tpu.core_type = #tpu.core_type<tc>, window_params = [{transform_indices = @transform_0, window_bounds = array<i64: 8, 128>}, {pipeline_mode = #tpu.pipeline_mode<synchronous>, transform_indices = @transform_1, window_bounds = array<i64: 3, 4, 8, 1>}, {transform_indices = @transform_2, window_bounds = array<i64: 8, 128>}]} {
    %c0 = arith.constant 0 : index
    %c0_0 = arith.constant 0 : index
    %0 = vector.load %arg1[%c0, %c0_0] : memref<8x128xf32, #tpu.memory_space<vmem>>, vector<8x128xf32>
    %c0_1 = arith.constant 0 : index
    %c0_2 = arith.constant 0 : index
    %c0_3 = arith.constant 0 : index
    %c0_4 = arith.constant 0 : index
    %1 = vector.load %arg2[%c0_1, %c0_2, %c0_3, %c0_4] : memref<3x4x8x1xf32, #tpu.memory_space<vmem>>, vector<1x1x8x1xf32>
    %2 = vector.shape_cast %1 : vector<1x1x8x1xf32> to vector<8x1xf32>
    %c0_5 = arith.constant 0 : index
    %c1 = arith.constant 1 : index
    %c0_6 = arith.constant 0 : index
    %c0_7 = arith.constant 0 : index
    %3 = vector.load %arg2[%c0_5, %c1, %c0_6, %c0_7] : memref<3x4x8x1xf32, #tpu.memory_space<vmem>>, vector<1x1x8x1xf32>
    %4 = vector.shape_cast %3 : vector<1x1x8x1xf32> to vector<8x1xf32>
    %c0_8 = arith.constant 0 : index
    %c2 = arith.constant 2 : index
    %c0_9 = arith.constant 0 : index
    %c0_10 = arith.constant 0 : index
    %5 = vector.load %arg2[%c0_8, %c2, %c0_9, %c0_10] : memref<3x4x8x1xf32, #tpu.memory_space<vmem>>, vector<1x1x8x1xf32>
    %6 = vector.shape_cast %5 : vector<1x1x8x1xf32> to vector<8x1xf32>
    %c0_11 = arith.constant 0 : index
    %c3 = arith.constant 3 : index
    %c0_12 = arith.constant 0 : index
    %c0_13 = arith.constant 0 : index
    %7 = vector.load %arg2[%c0_11, %c3, %c0_12, %c0_13] : memref<3x4x8x1xf32, #tpu.memory_space<vmem>>, vector<1x1x8x1xf32>
    %8 = vector.shape_cast %7 : vector<1x1x8x1xf32> to vector<8x1xf32>
    %9 = math.sin %0 : vector<8x128xf32>
    %10 = vector.broadcast %2 : vector<8x1xf32> to vector<8x128xf32>
    %11 = arith.mulf %9, %10 : vector<8x128xf32>
    %12 = math.cos %0 : vector<8x128xf32>
    %13 = vector.broadcast %4 : vector<8x1xf32> to vector<8x128xf32>
    %14 = arith.mulf %12, %13 : vector<8x128xf32>
    %15 = arith.addf %11, %14 : vector<8x128xf32>
    %c1_i32 = arith.constant 1 : i32
    %16 = tpu.dynamic_rotate %15 by %c1_i32 dim 0 : vector<8x128xf32>, i32 -> vector<8x128xf32>
    %17 = vector.broadcast %6 : vector<8x1xf32> to vector<8x128xf32>
    %18 = arith.mulf %15, %17 : vector<8x128xf32>
    %19 = vector.broadcast %8 : vector<8x1xf32> to vector<8x128xf32>
    %20 = arith.mulf %16, %19 : vector<8x128xf32>
    %21 = arith.addf %18, %20 : vector<8x128xf32>
    %c1_14 = arith.constant 1 : index
    %c0_15 = arith.constant 0 : index
    %c0_16 = arith.constant 0 : index
    %c0_17 = arith.constant 0 : index
    %22 = vector.load %arg2[%c1_14, %c0_15, %c0_16, %c0_17] : memref<3x4x8x1xf32, #tpu.memory_space<vmem>>, vector<1x1x8x1xf32>
    %23 = vector.shape_cast %22 : vector<1x1x8x1xf32> to vector<8x1xf32>
    %c1_18 = arith.constant 1 : index
    %c1_19 = arith.constant 1 : index
    %c0_20 = arith.constant 0 : index
    %c0_21 = arith.constant 0 : index
    %24 = vector.load %arg2[%c1_18, %c1_19, %c0_20, %c0_21] : memref<3x4x8x1xf32, #tpu.memory_space<vmem>>, vector<1x1x8x1xf32>
    %25 = vector.shape_cast %24 : vector<1x1x8x1xf32> to vector<8x1xf32>
    %c1_22 = arith.constant 1 : index
    %c2_23 = arith.constant 2 : index
    %c0_24 = arith.constant 0 : index
    %c0_25 = arith.constant 0 : index
    %26 = vector.load %arg2[%c1_22, %c2_23, %c0_24, %c0_25] : memref<3x4x8x1xf32, #tpu.memory_space<vmem>>, vector<1x1x8x1xf32>
    %27 = vector.shape_cast %26 : vector<1x1x8x1xf32> to vector<8x1xf32>
    %c1_26 = arith.constant 1 : index
    %c3_27 = arith.constant 3 : index
    %c0_28 = arith.constant 0 : index
    %c0_29 = arith.constant 0 : index
    %28 = vector.load %arg2[%c1_26, %c3_27, %c0_28, %c0_29] : memref<3x4x8x1xf32, #tpu.memory_space<vmem>>, vector<1x1x8x1xf32>
    %29 = vector.shape_cast %28 : vector<1x1x8x1xf32> to vector<8x1xf32>
    %30 = math.sin %21 : vector<8x128xf32>
    %31 = vector.broadcast %23 : vector<8x1xf32> to vector<8x128xf32>
    %32 = arith.mulf %30, %31 : vector<8x128xf32>
    %33 = math.cos %21 : vector<8x128xf32>
    %34 = vector.broadcast %25 : vector<8x1xf32> to vector<8x128xf32>
    %35 = arith.mulf %33, %34 : vector<8x128xf32>
    %36 = arith.addf %32, %35 : vector<8x128xf32>
    %c1_i32_30 = arith.constant 1 : i32
    %37 = tpu.dynamic_rotate %36 by %c1_i32_30 dim 0 : vector<8x128xf32>, i32 -> vector<8x128xf32>
    %38 = vector.broadcast %27 : vector<8x1xf32> to vector<8x128xf32>
    %39 = arith.mulf %36, %38 : vector<8x128xf32>
    %40 = vector.broadcast %29 : vector<8x1xf32> to vector<8x128xf32>
    %41 = arith.mulf %37, %40 : vector<8x128xf32>
    %42 = arith.addf %39, %41 : vector<8x128xf32>
    %c2_31 = arith.constant 2 : index
    %c0_32 = arith.constant 0 : index
    %c0_33 = arith.constant 0 : index
    %c0_34 = arith.constant 0 : index
    %43 = vector.load %arg2[%c2_31, %c0_32, %c0_33, %c0_34] : memref<3x4x8x1xf32, #tpu.memory_space<vmem>>, vector<1x1x8x1xf32>
    %44 = vector.shape_cast %43 : vector<1x1x8x1xf32> to vector<8x1xf32>
    %c2_35 = arith.constant 2 : index
    %c1_36 = arith.constant 1 : index
    %c0_37 = arith.constant 0 : index
    %c0_38 = arith.constant 0 : index
    %45 = vector.load %arg2[%c2_35, %c1_36, %c0_37, %c0_38] : memref<3x4x8x1xf32, #tpu.memory_space<vmem>>, vector<1x1x8x1xf32>
    %46 = vector.shape_cast %45 : vector<1x1x8x1xf32> to vector<8x1xf32>
    %c2_39 = arith.constant 2 : index
    %c2_40 = arith.constant 2 : index
    %c0_41 = arith.constant 0 : index
    %c0_42 = arith.constant 0 : index
    %47 = vector.load %arg2[%c2_39, %c2_40, %c0_41, %c0_42] : memref<3x4x8x1xf32, #tpu.memory_space<vmem>>, vector<1x1x8x1xf32>
    %48 = vector.shape_cast %47 : vector<1x1x8x1xf32> to vector<8x1xf32>
    %c2_43 = arith.constant 2 : index
    %c3_44 = arith.constant 3 : index
    %c0_45 = arith.constant 0 : index
    %c0_46 = arith.constant 0 : index
    %49 = vector.load %arg2[%c2_43, %c3_44, %c0_45, %c0_46] : memref<3x4x8x1xf32, #tpu.memory_space<vmem>>, vector<1x1x8x1xf32>
    %50 = vector.shape_cast %49 : vector<1x1x8x1xf32> to vector<8x1xf32>
    %51 = math.sin %42 : vector<8x128xf32>
    %52 = vector.broadcast %44 : vector<8x1xf32> to vector<8x128xf32>
    %53 = arith.mulf %51, %52 : vector<8x128xf32>
    %54 = math.cos %42 : vector<8x128xf32>
    %55 = vector.broadcast %46 : vector<8x1xf32> to vector<8x128xf32>
    %56 = arith.mulf %54, %55 : vector<8x128xf32>
    %57 = arith.addf %53, %56 : vector<8x128xf32>
    %c1_i32_47 = arith.constant 1 : i32
    %58 = tpu.dynamic_rotate %57 by %c1_i32_47 dim 0 : vector<8x128xf32>, i32 -> vector<8x128xf32>
    %59 = vector.broadcast %48 : vector<8x1xf32> to vector<8x128xf32>
    %60 = arith.mulf %57, %59 : vector<8x128xf32>
    %61 = vector.broadcast %50 : vector<8x1xf32> to vector<8x128xf32>
    %62 = arith.mulf %58, %61 : vector<8x128xf32>
    %63 = arith.addf %60, %62 : vector<8x128xf32>
    %c0_48 = arith.constant 0 : index
    %c0_49 = arith.constant 0 : index
    %64 = vector.load %arg3[%c0_48, %c0_49] : memref<8x128xf32, #tpu.memory_space<vmem>>, vector<8x128xf32>
    tpu.vector_store %arg3[%c0_48, %c0_49], %63 {strides = array<i32>} : memref<8x128xf32, #tpu.memory_space<vmem>>, vector<8x128xf32>,
    return
  }
  func.func @transform_0(%arg0: i32) -> (i32, i32) {
    %c0_i32 = arith.constant 0 : i32
    %c0_i32_0 = arith.constant 0 : i32
    return %c0_i32, %arg0 : i32, i32
  }
  func.func @transform_1(%arg0: i32) -> (i32, i32, i32, i32) {
    %c0_i32 = arith.constant 0 : i32
    %c0_i32_0 = arith.constant 0 : i32
    %c0_i32_1 = arith.constant 0 : i32
    %c0_i32_2 = arith.constant 0 : i32
    %c0_i32_3 = arith.constant 0 : i32
    return %c0_i32, %c0_i32_0, %c0_i32_1, %c0_i32_2 : i32, i32, i32, i32
  }
  func.func @transform_2(%arg0: i32) -> (i32, i32) {
    %c0_i32 = arith.constant 0 : i32
    %c0_i32_0 = arith.constant 0 : i32
    return %c0_i32, %arg0 : i32, i32
  }
}

</mosaic_0001>

<llo_original>
// kernel: tpu_custom_call.1
$region0: #{tpu_custom_call.1}
  #allocation0 [shape = 'u32[]', space=smem, size = 0x4, offset = 0x4, fixed_abs, tag = 'smem constant byte address 0x4 - core index']
  #allocation1 [shape = 'u32[144,128]{1,0:T(1,128)}', space=vmem, size = 0x12000, scoped, tag = 'internal scratch']
  %s0 = inlined_call_operand.vmem [shape: f32[8,256], index: 0, kind: input, shape index: {}]
  %s1 = inlined_call_operand.vmem [shape: f32[3,4,8,1], index: 1, kind: input, shape index: {}]
  %s2 = inlined_call_operand.hbm [shape: f32[8,256], index: 2, kind: output, shape index: {}]
  %s3 = sld [smem:[#allocation0]]
  $region41: #{tpu_custom_call.1} parent=0
    _
  %s5 = ssub.s32 1, %s3
  %s6 = scalar_select 0, %s5, %s3
  $region1: #{tpu_custom_call.1} parent=0
    #allocation2 [shape = 'u8[8192]{0}', space=vmem, size = 0x2000, scoped, tag = 'output window, operand 0']
    #allocation3 [shape = 's32[2]{0}', space=sflag, size = 0x8, scoped, tag = 'scoped memory for tpu_custom_call.1']
    %7 = vsyncpa [#allocation3], 0
    %s8 = scalar_lea.sflag [#allocation3], 1
    %9 = vsyncpa %s8, 0
    loop: start=0, step=1, limit=4
    $region2: #{tpu_custom_call.1} parent=1 // loop_pre_header
      _
    $region3: #{tpu_custom_call.1} parent=1 // loop_header
      %s11 = sphi 0, %s15
      %p12 = scmp.ge.s32.totalorder %s11, 4
      %s21 = sphi 0, %s23
      %s24 = sphi 0, %s21
      %s25 = sphi 0, %s24
      %s41 = sphi 0, %s25
      %s45 = sphi 0, %s45
      %s47 = sphi 0, %s45
      %s48 = sphi 0, %s47
      %s62 = sphi 0, %s48
      %s68 = sphi 0, %s70
      %s71 = sphi 0, %s68
      %s72 = sphi 0, %s71
      %s88 = sphi 0, %s72
    $region4: #{tpu_custom_call.1} parent=1 // loop_header_branch
      %14 = sbr.rel (%p12) target = $region8
    $region5: #{tpu_custom_call.1} parent=1 // loop_body
      %s16 = ssub.s32 %s11, 1
      %s17 = ssub.s32 %s11, 2
      %s18 = sadd.s32 %s11, 1
      %s19 = ssub.s32 %s11, %s18
      %p20 = scmp.eq.s32.totalorder %s19, 0
      %s22 = sadd.s32 %s21, 1
      %s23 = scalar_select %p20, %s21, %s22
      %p26 = pneg %p20
      %p27 = scmp.eq.s32.totalorder %s11, 1
      %p28 = por %p26, %p27
      %p29 = scmp.ne.s32.totalorder %s21, %s24
      %p30 = scmp.eq.s32.totalorder %s11, 0
      %p31 = por %p29, %p30
      %p32 = scmp.ne.s32.totalorder %s21, %s24
      %p33 = scmp.eq.s32.totalorder %s16, 1
      %p34 = por %p32, %p33
      %p35 = scmp.ne.s32.totalorder %s24, %s25
      %p36 = scmp.eq.s32.totalorder %s16, 0
      %p37 = por %p35, %p36
      %p38 = scmp.ne.s32.totalorder %s24, %s25
      %p39 = scmp.eq.s32.totalorder %s17, 1
      %p40 = por %p38, %p39
      %p42 = scmp.ne.s32.totalorder %s25, %s41
      %p43 = scmp.eq.s32.totalorder %s17, 0
      %p44 = por %p42, %p43
      %s46 = sadd.s32 %s45, 1
      %p49 = scmp.eq.s32.totalorder %s11, 1
      %p50 = scmp.ne.s32.totalorder %s45, %s47
      %p51 = scmp.eq.s32.totalorder %s11, 0
      %p52 = por %p50, %p51
      %p53 = scmp.ne.s32.totalorder %s45, %s47
      %p54 = scmp.eq.s32.totalorder %s16, 1
      %p55 = por %p53, %p54
      %p56 = scmp.ne.s32.totalorder %s47, %s48
      %p57 = scmp.eq.s32.totalorder %s16, 0
      %p58 = por %p56, %p57
      %p59 = scmp.ne.s32.totalorder %s47, %s48
      %p60 = scmp.eq.s32.totalorder %s17, 1
      %p61 = por %p59, %p60
      %p63 = scmp.ne.s32.totalorder %s48, %s62
      %p64 = scmp.eq.s32.totalorder %s17, 0
      %p65 = por %p63, %p64
      %s66 = ssub.s32 %s11, %s18
      %p67 = scmp.eq.s32.totalorder %s66, 0
      %s69 = sadd.s32 %s68, 1
      %s70 = scalar_select %p67, %s68, %s69
      %p73 = pneg %p67
      %p74 = scmp.eq.s32.totalorder %s11, 1
      %p75 = por %p73, %p74
      %p76 = scmp.ne.s32.totalorder %s68, %s71
      %p77 = scmp.eq.s32.totalorder %s11, 0
      %p78 = por %p76, %p77
      %p79 = scmp.ne.s32.totalorder %s68, %s71
      %p80 = scmp.eq.s32.totalorder %s16, 1
      %p81 = por %p79, %p80
      %p82 = scmp.ne.s32.totalorder %s71, %s72
      %p83 = scmp.eq.s32.totalorder %s16, 0
      %p84 = por %p82, %p83
      %p85 = scmp.ne.s32.totalorder %s71, %s72
      %p86 = scmp.eq.s32.totalorder %s17, 1
      %p87 = por %p85, %p86
      %p89 = scmp.ne.s32.totalorder %s72, %s88
      %p90 = scmp.eq.s32.totalorder %s17, 0
      %p91 = por %p89, %p90
      %p92 = scmp.le.s32.totalorder 1, %s11
      %p93 = scmp.lt.s32.totalorder %s11, 3
      %p94 = pnand %p92, %p93
      %p95 = pneg %p94
      // Predicated region
      $region9: #{tpu_custom_call.1} parent=5 // pred_check
        _
      $region10: #{tpu_custom_call.1} parent=5 // pred_check_branch
        %97 = sbr.rel (%p94) target = $region12
      $region11: #{tpu_custom_call.1} parent=5 // pred_region
        %s98 = ssub.s32 %s11, 1
        // Predicated region
        $region13: #{tpu_custom_call.1} parent=11 // pred_check
          %p99 = pneg %p58
        $region14: #{tpu_custom_call.1} parent=11 // pred_check_branch
          %101 = sbr.rel (%p99) target = $region16
        $region15: #{tpu_custom_call.1} parent=11 // pred_region
          _
        $region16: #{tpu_custom_call.1} parent=11 // pred_fallthru
          _
      $region12: #{tpu_custom_call.1} parent=5 // pred_fallthru
        _
      %p102 = scmp.lt.s32.totalorder %s11, 2
      // Predicated region
      $region17: #{tpu_custom_call.1} parent=5 // pred_check
        %p103 = pneg %p102
      $region18: #{tpu_custom_call.1} parent=5 // pred_check_branch
        %105 = sbr.rel (%p103) target = $region20
      $region19: #{tpu_custom_call.1} parent=5 // pred_region
        // Predicated region
        $region21: #{tpu_custom_call.1} parent=19 // pred_check
          %p106 = pneg %p31
        $region22: #{tpu_custom_call.1} parent=19 // pred_check_branch
          %108 = sbr.rel (%p106) target = $region24
        $region23: #{tpu_custom_call.1} parent=19 // pred_region
          %p109 = scmp.lt.s32.totalorder %s11, 1
          %s110 = scalar_select %p109, %s11, 1
          %s111 = smul.addr %s110, 8
          %s112 = scalar_lea.vmem %s0, %s111
        $region24: #{tpu_custom_call.1} parent=19 // pred_fallthru
          _
      $region20: #{tpu_custom_call.1} parent=5 // pred_fallthru
        _
      %p113 = scmp.le.s32.totalorder 1, %s11
      %p114 = scmp.lt.s32.totalorder %s11, 3
      %p115 = pnand %p113, %p114
      %p116 = pneg %p115
      // Predicated region
      $region25: #{tpu_custom_call.1} parent=5 // pred_check
        _
      $region26: #{tpu_custom_call.1} parent=5 // pred_check_branch
        %118 = sbr.rel (%p115) target = $region28
      $region27: #{tpu_custom_call.1} parent=5 // pred_region
        %s119 = ssub.s32 %s11, 1
        %p120 = scmp.lt.s32.totalorder %s16, 1
        %s121 = scalar_select %p120, %s16, 1
        %s122 = smul.addr %s121, 8
        %s123 = scalar_lea.vmem %s0, %s122
        %p124 = pneg %p37
        %p125 = pneg %p34
        %p126 = pneg %p58
        %p127 = pneg %p55
        %p128 = pneg %p84
        %p129 = pneg %p81
        %s130 = sand.u32 %s71, 1
        %s131 = scalar_lea.sflag [#allocation3], %s130
        %s132 = sand.u32 %s71, 1
        %s133 = smul.addr %s132, 8
        %s134 = scalar_lea.vmem [#allocation2], %s133
        %p135 = scmp.lt.s32.totalorder %s16, 1
        %s136 = scalar_select %p135, %s16, 1
        %s137 = smul.addr %s136, 8
        %s138 = scalar_lea.vmem %s0, %s137
        %v139 = vld [vmem:[%s138] sm:$0xff]
        %v140 = vld [vmem:[%s1] sm:$0xff]
        %s141 = scalar_lea.vmem %s1, 8
        %v142 = vld [vmem:[%s141] sm:$0xff]
        %s143 = scalar_lea.vmem %s1, 16
        %v144 = vld [vmem:[%s143] sm:$0xff]
        %s145 = scalar_lea.vmem %s1, 24
        %v146 = vld [vmem:[%s145] sm:$0xff]
        %v147 = vand.u32 2147483647, %v139
        %vm148 = vcmp.le.f32.partialorder %v147, 0.7853982
        %vm149 = vcmp.lt.s32.totalorder %v139, 0
        %v150 = vand.u32 %v139, 2139095040
        %v151 = vshrl.u32 %v150, 23
        %v152 = vsub.s32 %v151, 127
        %v153 = vand.u32 2147483647, %v139
        %v154 = vand.u32 %v153, 8388607
        %v155 = vor.u32 %v154, 8388608
        %v156 = vsub.s32 0, %v155
        %v157 = vadd.s32 %v152, 1
        %vm158 = vcmp.gt.s32.totalorder %v157, 0
        %v159 = vsel %vm158, %v157, 0
        %v160 = vshrl.u32 %v159, 5
        %v161 = vand.u32 %v159, 31
        %v162 = vsub.s32 32, %v161
        %v163 = vshrl.u32 683565275, %v162
        %v164 = vshll.u32 683565275, %v161
        %v165 = vshrl.u32 2475754826, %v162
        %v166 = vor.u32 %v164, %v165
        %v167 = vshll.u32 2475754826, %v161
        %v168 = vshrl.u32 2131351028, %v162
        %v169 = vor.u32 %v167, %v168
        %v170 = vshll.u32 2131351028, %v161
        %v171 = vshrl.u32 2102212464, %v162
        %v172 = vor.u32 %v170, %v171
        %v173 = vshll.u32 2102212464, %v161
        %v174 = vshrl.u32 920167782, %v162
        %v175 = vor.u32 %v173, %v174
        %v176 = vshll.u32 920167782, %v161
        %v177 = vshrl.u32 1326507024, %v162
        %v178 = vor.u32 %v176, %v177
        %vm179 = vcmp.lt.s32.totalorder %v160, 1
        %vm180 = vcmp.lt.s32.totalorder %v160, 2
        %vm181 = vcmp.lt.s32.totalorder %v160, 3
        %vm182 = vcmp.lt.s32.totalorder %v160, 4
        %v183 = vsel %vm179, %v163, %v166
        %v184 = vsel %vm182, %v172, 2102212464
        %v185 = vsel %vm181, %v169, %v184
        %v186 = vsel %vm180, %v183, %v185
        %v187 = vsel %vm179, %v166, %v169
        %v188 = vsel %vm182, %v175, 920167782
        %v189 = vsel %vm181, %v172, %v188
        %v190 = vsel %vm180, %v187, %v189
        %v191 = vsel %vm179, %v169, %v172
        %v192 = vsel %vm182, %v178, 1326507024
        %v193 = vsel %vm181, %v175, %v192
        %v194 = vsel %vm180, %v191, %v193
        %v195 = vshll.u32 %v155, 8
        %v196 = vmul.u32.u64.compose %v195, %v194
        %v197 = vextract.low.u32 %v196
        %v198 = vextract.high.u32 %v196
        %v199 = vmul.u32.u64.compose %v195, %v190
        %v200 = vextract.low.u32 %v199
        %v201 = vextract.high.u32 %v199
        %v202 = vmul.u32 %v195, %v186
        %v203 = vadd.s32 %v198, %v200
        %vm204 = vc.u32 %v198, %v200
        %v205 = vadd.s32 %v201, 1
        %v206 = vsel %vm204, %v205, %v201
        %v207 = vadd.s32 %v202, %v206
        %v208 = vadd.s32 %v207, 536870912
        %v209 = vshrl.u32 %v208, 30
        %v210 = vshll.u32 %v209, 30
        %v211 = vsub.s32 %v207, %v210
        %vm212 = vcmp.lt.s32.totalorder %v211, 0
        %v213 = vsub.s32 0, %v211
        %v214 = vsel %vm212, %v213, %v211
        %v215 = vclz %v214
        %v216 = vsub.s32 %v215, 2
        %vm217 = vcmp.gt.s32.totalorder 0, %v216
        %v218 = vsel %vm217, 0, %v216
        %v219 = vsub.s32 32, %v218
        %v220 = vshll.u32 %v211, %v218
        %v221 = vshrl.u32 %v203, %v219
        %v222 = vor.u32 %v220, %v221
        %v223 = vsub.s32 4294967266, %v218
        %v224 = vadd.s32 %v223, 127
        %v225 = vshll.u32 %v224, 23
        %v226 = vor.u32 4788187, %v225
        %v227 = vand.u32 2147483647, %v226
        %v229 = vcvt.s32.f32 %v222
        %v230 = vmul.f32 %v229, %v227
        %v231 = vxor.u32 %v230, 2147483648
        %v232 = vsel %vm149, %v231, %v230
        %v233 = vsub.s32 4, %v209
        %v234 = vsel %vm149, %v233, %v209
        %v235 = vsel %vm148, %v139, %v232
        %v236 = vsel %vm148, 0, %v234
        %v237 = vcosq.f32.pop %v235
        %v238 = vsinq.f32.pop %v235
        %vm239 = vweird.f32 %v139
        %v240 = vadd.s32 %v236, 3
        %v241 = vand.u32 %v240, 3
        %vm242 = vcmp.lt.s32.totalorder %v241, 2
        %vm243 = vcmp.eq.s32.totalorder %v241, 0
        %v244 = vxor.u32 %v238, 2147483648
        %v245 = vsel %vm243, %v237, %v244
        %vm246 = vcmp.eq.s32.totalorder %v241, 2
        %v247 = vxor.u32 %v237, 2147483648
        %v248 = vsel %vm246, %v247, %v238
        %v249 = vsel %vm242, %v245, %v248
        %v250 = vsel %vm239, nan, %v249
        %252 = vset.pattern.permute.xlu0 0
        %253 = vperm.xlu0 %252, %v140
        %v254 = vpop.permute.xlu0 %253
        %v256 = vmul.f32 %v250, %v254
        %v257 = vand.u32 2147483647, %v139
        %vm258 = vcmp.le.f32.partialorder %v257, 0.7853982
        %vm259 = vcmp.lt.s32.totalorder %v139, 0
        %v260 = vand.u32 %v139, 2139095040
        %v261 = vshrl.u32 %v260, 23
        %v262 = vsub.s32 %v261, 127
        %v263 = vand.u32 2147483647, %v139
        %v264 = vand.u32 %v263, 8388607
        %v265 = vor.u32 %v264, 8388608
        %v266 = vsub.s32 0, %v265
        %v267 = vadd.s32 %v262, 1
        %vm268 = vcmp.gt.s32.totalorder %v267, 0
        %v269 = vsel %vm268, %v267, 0
        %v270 = vshrl.u32 %v269, 5
        %v271 = vand.u32 %v269, 31
        %v272 = vsub.s32 32, %v271
        %v273 = vshrl.u32 683565275, %v272
        %v274 = vshll.u32 683565275, %v271
        %v275 = vshrl.u32 2475754826, %v272
        %v276 = vor.u32 %v274, %v275
        %v277 = vshll.u32 2475754826, %v271
        %v278 = vshrl.u32 2131351028, %v272
        %v279 = vor.u32 %v277, %v278
        %v280 = vshll.u32 2131351028, %v271
        %v281 = vshrl.u32 2102212464, %v272
        %v282 = vor.u32 %v280, %v281
        %v283 = vshll.u32 2102212464, %v271
        %v284 = vshrl.u32 920167782, %v272
        %v285 = vor.u32 %v283, %v284
        %v286 = vshll.u32 920167782, %v271
        %v287 = vshrl.u32 1326507024, %v272
        %v288 = vor.u32 %v286, %v287
        %vm289 = vcmp.lt.s32.totalorder %v270, 1
        %vm290 = vcmp.lt.s32.totalorder %v270, 2
        %vm291 = vcmp.lt.s32.totalorder %v270, 3
        %vm292 = vcmp.lt.s32.totalorder %v270, 4
        %v293 = vsel %vm289, %v273, %v276
        %v294 = vsel %vm292, %v282, 2102212464
        %v295 = vsel %vm291, %v279, %v294
        %v296 = vsel %vm290, %v293, %v295
        %v297 = vsel %vm289, %v276, %v279
        %v298 = vsel %vm292, %v285, 920167782
        %v299 = vsel %vm291, %v282, %v298
        %v300 = vsel %vm290, %v297, %v299
        %v301 = vsel %vm289, %v279, %v282
        %v302 = vsel %vm292, %v288, 1326507024
        %v303 = vsel %vm291, %v285, %v302
        %v304 = vsel %vm290, %v301, %v303
        %v305 = vshll.u32 %v265, 8
        %v306 = vmul.u32.u64.compose %v305, %v304
        %v307 = vextract.low.u32 %v306
        %v308 = vextract.high.u32 %v306
        %v309 = vmul.u32.u64.compose %v305, %v300
        %v310 = vextract.low.u32 %v309
        %v311 = vextract.high.u32 %v309
        %v312 = vmul.u32 %v305, %v296
        %v313 = vadd.s32 %v308, %v310
        %vm314 = vc.u32 %v308, %v310
        %v315 = vadd.s32 %v311, 1
        %v316 = vsel %vm314, %v315, %v311
        %v317 = vadd.s32 %v312, %v316
        %v318 = vadd.s32 %v317, 536870912
        %v319 = vshrl.u32 %v318, 30
        %v320 = vshll.u32 %v319, 30
        %v321 = vsub.s32 %v317, %v320
        %vm322 = vcmp.lt.s32.totalorder %v321, 0
        %v323 = vsub.s32 0, %v321
        %v324 = vsel %vm322, %v323, %v321
        %v325 = vclz %v324
        %v326 = vsub.s32 %v325, 2
        %vm327 = vcmp.gt.s32.totalorder 0, %v326
        %v328 = vsel %vm327, 0, %v326
        %v329 = vsub.s32 32, %v328
        %v330 = vshll.u32 %v321, %v328
        %v331 = vshrl.u32 %v313, %v329
        %v332 = vor.u32 %v330, %v331
        %v333 = vsub.s32 4294967266, %v328
        %v334 = vadd.s32 %v333, 127
        %v335 = vshll.u32 %v334, 23
        %v336 = vor.u32 4788187, %v335
        %v337 = vand.u32 2147483647, %v336
        %v339 = vcvt.s32.f32 %v332
        %v340 = vmul.f32 %v339, %v337
        %v341 = vxor.u32 %v340, 2147483648
        %v342 = vsel %vm259, %v341, %v340
        %v343 = vsub.s32 4, %v319
        %v344 = vsel %vm259, %v343, %v319
        %v345 = vsel %vm258, %v139, %v342
        %v346 = vsel %vm258, 0, %v344
        %v347 = vcosq.f32.pop %v345
        %v348 = vsinq.f32.pop %v345
        %vm349 = vweird.f32 %v139
        %v350 = vand.u32 %v346, 3
        %vm351 = vcmp.lt.s32.totalorder %v350, 2
        %vm352 = vcmp.eq.s32.totalorder %v350, 0
        %v353 = vxor.u32 %v348, 2147483648
        %v354 = vsel %vm352, %v347, %v353
        %vm355 = vcmp.eq.s32.totalorder %v350, 2
        %v356 = vxor.u32 %v347, 2147483648
        %v357 = vsel %vm355, %v356, %v348
        %v358 = vsel %vm351, %v354, %v357
        %v359 = vsel %vm349, nan, %v358
        %361 = vset.pattern.permute.xlu0 0
        %362 = vperm.xlu0 %361, %v142
        %v363 = vpop.permute.xlu0 %362
        %v365 = vmul.f32 %v359, %v363
        %v366 = vadd.f32 %v256, %v365
        %v367 = vrot.slane %v366, 7
        %369 = vset.pattern.permute.xlu0 0
        %370 = vperm.xlu0 %369, %v144
        %v371 = vpop.permute.xlu0 %370
        %v373 = vmul.f32 %v366, %v371
        %375 = vset.pattern.permute.xlu0 0
        %376 = vperm.xlu0 %375, %v146
        %v377 = vpop.permute.xlu0 %376
        %v379 = vmul.f32 %v367, %v377
        %v380 = vadd.f32 %v373, %v379
        %s381 = scalar_lea.vmem %s1, 32
        %v382 = vld [vmem:[%s381] sm:$0xff]
        %s383 = scalar_lea.vmem %s1, 40
        %v384 = vld [vmem:[%s383] sm:$0xff]
        %s385 = scalar_lea.vmem %s1, 48
        %v386 = vld [vmem:[%s385] sm:$0xff]
        %s387 = scalar_lea.vmem %s1, 56
        %v388 = vld [vmem:[%s387] sm:$0xff]
        %v389 = vand.u32 2147483647, %v380
        %vm390 = vcmp.le.f32.partialorder %v389, 0.7853982
        %vm391 = vcmp.lt.s32.totalorder %v380, 0
        %v392 = vand.u32 %v380, 2139095040
        %v393 = vshrl.u32 %v392, 23
        %v394 = vsub.s32 %v393, 127
        %v395 = vand.u32 2147483647, %v380
        %v396 = vand.u32 %v395, 8388607
        %v397 = vor.u32 %v396, 8388608
        %v398 = vsub.s32 0, %v397
        %v399 = vadd.s32 %v394, 1
        %vm400 = vcmp.gt.s32.totalorder %v399, 0
        %v401 = vsel %vm400, %v399, 0
        %v402 = vshrl.u32 %v401, 5
        %v403 = vand.u32 %v401, 31
        %v404 = vsub.s32 32, %v403
        %v405 = vshrl.u32 683565275, %v404
        %v406 = vshll.u32 683565275, %v403
        %v407 = vshrl.u32 2475754826, %v404
        %v408 = vor.u32 %v406, %v407
        %v409 = vshll.u32 2475754826, %v403
        %v410 = vshrl.u32 2131351028, %v404
        %v411 = vor.u32 %v409, %v410
        %v412 = vshll.u32 2131351028, %v403
        %v413 = vshrl.u32 2102212464, %v404
        %v414 = vor.u32 %v412, %v413
        %v415 = vshll.u32 2102212464, %v403
        %v416 = vshrl.u32 920167782, %v404
        %v417 = vor.u32 %v415, %v416
        %v418 = vshll.u32 920167782, %v403
        %v419 = vshrl.u32 1326507024, %v404
        %v420 = vor.u32 %v418, %v419
        %vm421 = vcmp.lt.s32.totalorder %v402, 1
        %vm422 = vcmp.lt.s32.totalorder %v402, 2
        %vm423 = vcmp.lt.s32.totalorder %v402, 3
        %vm424 = vcmp.lt.s32.totalorder %v402, 4
        %v425 = vsel %vm421, %v405, %v408
        %v426 = vsel %vm424, %v414, 2102212464
        %v427 = vsel %vm423, %v411, %v426
        %v428 = vsel %vm422, %v425, %v427
        %v429 = vsel %vm421, %v408, %v411
        %v430 = vsel %vm424, %v417, 920167782
        %v431 = vsel %vm423, %v414, %v430
        %v432 = vsel %vm422, %v429, %v431
        %v433 = vsel %vm421, %v411, %v414
        %v434 = vsel %vm424, %v420, 1326507024
        %v435 = vsel %vm423, %v417, %v434
        %v436 = vsel %vm422, %v433, %v435
        %v437 = vshll.u32 %v397, 8
        %v438 = vmul.u32.u64.compose %v437, %v436
        %v439 = vextract.low.u32 %v438
        %v440 = vextract.high.u32 %v438
        %v441 = vmul.u32.u64.compose %v437, %v432
        %v442 = vextract.low.u32 %v441
        %v443 = vextract.high.u32 %v441
        %v444 = vmul.u32 %v437, %v428
        %v445 = vadd.s32 %v440, %v442
        %vm446 = vc.u32 %v440, %v442
        %v447 = vadd.s32 %v443, 1
        %v448 = vsel %vm446, %v447, %v443
        %v449 = vadd.s32 %v444, %v448
        %v450 = vadd.s32 %v449, 536870912
        %v451 = vshrl.u32 %v450, 30
        %v452 = vshll.u32 %v451, 30
        %v453 = vsub.s32 %v449, %v452
        %vm454 = vcmp.lt.s32.totalorder %v453, 0
        %v455 = vsub.s32 0, %v453
        %v456 = vsel %vm454, %v455, %v453
        %v457 = vclz %v456
        %v458 = vsub.s32 %v457, 2
        %vm459 = vcmp.gt.s32.totalorder 0, %v458
        %v460 = vsel %vm459, 0, %v458
        %v461 = vsub.s32 32, %v460
        %v462 = vshll.u32 %v453, %v460
        %v463 = vshrl.u32 %v445, %v461
        %v464 = vor.u32 %v462, %v463
        %v465 = vsub.s32 4294967266, %v460
        %v466 = vadd.s32 %v465, 127
        %v467 = vshll.u32 %v466, 23
        %v468 = vor.u32 4788187, %v467
        %v469 = vand.u32 2147483647, %v468
        %v471 = vcvt.s32.f32 %v464
        %v472 = vmul.f32 %v471, %v469
        %v473 = vxor.u32 %v472, 2147483648
        %v474 = vsel %vm391, %v473, %v472
        %v475 = vsub.s32 4, %v451
        %v476 = vsel %vm391, %v475, %v451
        %v477 = vsel %vm390, %v380, %v474
        %v478 = vsel %vm390, 0, %v476
        %v479 = vcosq.f32.pop %v477
        %v480 = vsinq.f32.pop %v477
        %vm481 = vweird.f32 %v380
        %v482 = vadd.s32 %v478, 3
        %v483 = vand.u32 %v482, 3
        %vm484 = vcmp.lt.s32.totalorder %v483, 2
        %vm485 = vcmp.eq.s32.totalorder %v483, 0
        %v486 = vxor.u32 %v480, 2147483648
        %v487 = vsel %vm485, %v479, %v486
        %vm488 = vcmp.eq.s32.totalorder %v483, 2
        %v489 = vxor.u32 %v479, 2147483648
        %v490 = vsel %vm488, %v489, %v480
        %v491 = vsel %vm484, %v487, %v490
        %v492 = vsel %vm481, nan, %v491
        %494 = vset.pattern.permute.xlu0 0
        %495 = vperm.xlu0 %494, %v382
        %v496 = vpop.permute.xlu0 %495
        %v498 = vmul.f32 %v492, %v496
        %v499 = vand.u32 2147483647, %v380
        %vm500 = vcmp.le.f32.partialorder %v499, 0.7853982
        %vm501 = vcmp.lt.s32.totalorder %v380, 0
        %v502 = vand.u32 %v380, 2139095040
        %v503 = vshrl.u32 %v502, 23
        %v504 = vsub.s32 %v503, 127
        %v505 = vand.u32 2147483647, %v380
        %v506 = vand.u32 %v505, 8388607
        %v507 = vor.u32 %v506, 8388608
        %v508 = vsub.s32 0, %v507
        %v509 = vadd.s32 %v504, 1
        %vm510 = vcmp.gt.s32.totalorder %v509, 0
        %v511 = vsel %vm510, %v509, 0
        %v512 = vshrl.u32 %v511, 5
        %v513 = vand.u32 %v511, 31
        %v514 = vsub.s32 32, %v513
        %v515 = vshrl.u32 683565275, %v514
        %v516 = vshll.u32 683565275, %v513
        %v517 = vshrl.u32 2475754826, %v514
        %v518 = vor.u32 %v516, %v517
        %v519 = vshll.u32 2475754826, %v513
        %v520 = vshrl.u32 2131351028, %v514
        %v521 = vor.u32 %v519, %v520
        %v522 = vshll.u32 2131351028, %v513
        %v523 = vshrl.u32 2102212464, %v514
        %v524 = vor.u32 %v522, %v523
        %v525 = vshll.u32 2102212464, %v513
        %v526 = vshrl.u32 920167782, %v514
        %v527 = vor.u32 %v525, %v526
        %v528 = vshll.u32 920167782, %v513
        %v529 = vshrl.u32 1326507024, %v514
        %v530 = vor.u32 %v528, %v529
        %vm531 = vcmp.lt.s32.totalorder %v512, 1
        %vm532 = vcmp.lt.s32.totalorder %v512, 2
        %vm533 = vcmp.lt.s32.totalorder %v512, 3
        %vm534 = vcmp.lt.s32.totalorder %v512, 4
        %v535 = vsel %vm531, %v515, %v518
        %v536 = vsel %vm534, %v524, 2102212464
        %v537 = vsel %vm533, %v521, %v536
        %v538 = vsel %vm532, %v535, %v537
        %v539 = vsel %vm531, %v518, %v521
        %v540 = vsel %vm534, %v527, 920167782
        %v541 = vsel %vm533, %v524, %v540
        %v542 = vsel %vm532, %v539, %v541
        %v543 = vsel %vm531, %v521, %v524
        %v544 = vsel %vm534, %v530, 1326507024
        %v545 = vsel %vm533, %v527, %v544
        %v546 = vsel %vm532, %v543, %v545
        %v547 = vshll.u32 %v507, 8
        %v548 = vmul.u32.u64.compose %v547, %v546
        %v549 = vextract.low.u32 %v548
        %v550 = vextract.high.u32 %v548
        %v551 = vmul.u32.u64.compose %v547, %v542
        %v552 = vextract.low.u32 %v551
        %v553 = vextract.high.u32 %v551
        %v554 = vmul.u32 %v547, %v538
        %v555 = vadd.s32 %v550, %v552
        %vm556 = vc.u32 %v550, %v552
        %v557 = vadd.s32 %v553, 1
        %v558 = vsel %vm556, %v557, %v553
        %v559 = vadd.s32 %v554, %v558
        %v560 = vadd.s32 %v559, 536870912
        %v561 = vshrl.u32 %v560, 30
        %v562 = vshll.u32 %v561, 30
        %v563 = vsub.s32 %v559, %v562
        %vm564 = vcmp.lt.s32.totalorder %v563, 0
        %v565 = vsub.s32 0, %v563
        %v566 = vsel %vm564, %v565, %v563
        %v567 = vclz %v566
        %v568 = vsub.s32 %v567, 2
        %vm569 = vcmp.gt.s32.totalorder 0, %v568
        %v570 = vsel %vm569, 0, %v568
        %v571 = vsub.s32 32, %v570
        %v572 = vshll.u32 %v563, %v570
        %v573 = vshrl.u32 %v555, %v571
        %v574 = vor.u32 %v572, %v573
        %v575 = vsub.s32 4294967266, %v570
        %v576 = vadd.s32 %v575, 127
        %v577 = vshll.u32 %v576, 23
        %v578 = vor.u32 4788187, %v577
        %v579 = vand.u32 2147483647, %v578
        %v581 = vcvt.s32.f32 %v574
        %v582 = vmul.f32 %v581, %v579
        %v583 = vxor.u32 %v582, 2147483648
        %v584 = vsel %vm501, %v583, %v582
        %v585 = vsub.s32 4, %v561
        %v586 = vsel %vm501, %v585, %v561
        %v587 = vsel %vm500, %v380, %v584
        %v588 = vsel %vm500, 0, %v586
        %v589 = vcosq.f32.pop %v587
        %v590 = vsinq.f32.pop %v587
        %vm591 = vweird.f32 %v380
        %v592 = vand.u32 %v588, 3
        %vm593 = vcmp.lt.s32.totalorder %v592, 2
        %vm594 = vcmp.eq.s32.totalorder %v592, 0
        %v595 = vxor.u32 %v590, 2147483648
        %v596 = vsel %vm594, %v589, %v595
        %vm597 = vcmp.eq.s32.totalorder %v592, 2
        %v598 = vxor.u32 %v589, 2147483648
        %v599 = vsel %vm597, %v598, %v590
        %v600 = vsel %vm593, %v596, %v599
        %v601 = vsel %vm591, nan, %v600
        %603 = vset.pattern.permute.xlu0 0
        %604 = vperm.xlu0 %603, %v384
        %v605 = vpop.permute.xlu0 %604
        %v607 = vmul.f32 %v601, %v605
        %v608 = vadd.f32 %v498, %v607
        %v609 = vrot.slane %v608, 7
        %611 = vset.pattern.permute.xlu0 0
        %612 = vperm.xlu0 %611, %v386
        %v613 = vpop.permute.xlu0 %612
        %v615 = vmul.f32 %v608, %v613
        %617 = vset.pattern.permute.xlu0 0
        %618 = vperm.xlu0 %617, %v388
        %v619 = vpop.permute.xlu0 %618
        %v621 = vmul.f32 %v609, %v619
        %v622 = vadd.f32 %v615, %v621
        %s623 = scalar_lea.vmem %s1, 64
        %v624 = vld [vmem:[%s623] sm:$0xff]
        %s625 = scalar_lea.vmem %s1, 72
        %v626 = vld [vmem:[%s625] sm:$0xff]
        %s627 = scalar_lea.vmem %s1, 80
        %v628 = vld [vmem:[%s627] sm:$0xff]
        %s629 = scalar_lea.vmem %s1, 88
        %v630 = vld [vmem:[%s629] sm:$0xff]
        %v631 = vand.u32 2147483647, %v622
        %vm632 = vcmp.le.f32.partialorder %v631, 0.7853982
        %vm633 = vcmp.lt.s32.totalorder %v622, 0
        %v634 = vand.u32 %v622, 2139095040
        %v635 = vshrl.u32 %v634, 23
        %v636 = vsub.s32 %v635, 127
        %v637 = vand.u32 2147483647, %v622
        %v638 = vand.u32 %v637, 8388607
        %v639 = vor.u32 %v638, 8388608
        %v640 = vsub.s32 0, %v639
        %v641 = vadd.s32 %v636, 1
        %vm642 = vcmp.gt.s32.totalorder %v641, 0
        %v643 = vsel %vm642, %v641, 0
        %v644 = vshrl.u32 %v643, 5
        %v645 = vand.u32 %v643, 31
        %v646 = vsub.s32 32, %v645
        %v647 = vshrl.u32 683565275, %v646
        %v648 = vshll.u32 683565275, %v645
        %v649 = vshrl.u32 2475754826, %v646
        %v650 = vor.u32 %v648, %v649
        %v651 = vshll.u32 2475754826, %v645
        %v652 = vshrl.u32 2131351028, %v646
        %v653 = vor.u32 %v651, %v652
        %v654 = vshll.u32 2131351028, %v645
        %v655 = vshrl.u32 2102212464, %v646
        %v656 = vor.u32 %v654, %v655
        %v657 = vshll.u32 2102212464, %v645
        %v658 = vshrl.u32 920167782, %v646
        %v659 = vor.u32 %v657, %v658
        %v660 = vshll.u32 920167782, %v645
        %v661 = vshrl.u32 1326507024, %v646
        %v662 = vor.u32 %v660, %v661
        %vm663 = vcmp.lt.s32.totalorder %v644, 1
        %vm664 = vcmp.lt.s32.totalorder %v644, 2
        %vm665 = vcmp.lt.s32.totalorder %v644, 3
        %vm666 = vcmp.lt.s32.totalorder %v644, 4
        %v667 = vsel %vm663, %v647, %v650
        %v668 = vsel %vm666, %v656, 2102212464
        %v669 = vsel %vm665, %v653, %v668
        %v670 = vsel %vm664, %v667, %v669
        %v671 = vsel %vm663, %v650, %v653
        %v672 = vsel %vm666, %v659, 920167782
        %v673 = vsel %vm665, %v656, %v672
        %v674 = vsel %vm664, %v671, %v673
        %v675 = vsel %vm663, %v653, %v656
        %v676 = vsel %vm666, %v662, 1326507024
        %v677 = vsel %vm665, %v659, %v676
        %v678 = vsel %vm664, %v675, %v677
        %v679 = vshll.u32 %v639, 8
        %v680 = vmul.u32.u64.compose %v679, %v678
        %v681 = vextract.low.u32 %v680
        %v682 = vextract.high.u32 %v680
        %v683 = vmul.u32.u64.compose %v679, %v674
        %v684 = vextract.low.u32 %v683
        %v685 = vextract.high.u32 %v683
        %v686 = vmul.u32 %v679, %v670
        %v687 = vadd.s32 %v682, %v684
        %vm688 = vc.u32 %v682, %v684
        %v689 = vadd.s32 %v685, 1
        %v690 = vsel %vm688, %v689, %v685
        %v691 = vadd.s32 %v686, %v690
        %v692 = vadd.s32 %v691, 536870912
        %v693 = vshrl.u32 %v692, 30
        %v694 = vshll.u32 %v693, 30
        %v695 = vsub.s32 %v691, %v694
        %vm696 = vcmp.lt.s32.totalorder %v695, 0
        %v697 = vsub.s32 0, %v695
        %v698 = vsel %vm696, %v697, %v695
        %v699 = vclz %v698
        %v700 = vsub.s32 %v699, 2
        %vm701 = vcmp.gt.s32.totalorder 0, %v700
        %v702 = vsel %vm701, 0, %v700
        %v703 = vsub.s32 32, %v702
        %v704 = vshll.u32 %v695, %v702
        %v705 = vshrl.u32 %v687, %v703
        %v706 = vor.u32 %v704, %v705
        %v707 = vsub.s32 4294967266, %v702
        %v708 = vadd.s32 %v707, 127
        %v709 = vshll.u32 %v708, 23
        %v710 = vor.u32 4788187, %v709
        %v711 = vand.u32 2147483647, %v710
        %v713 = vcvt.s32.f32 %v706
        %v714 = vmul.f32 %v713, %v711
        %v715 = vxor.u32 %v714, 2147483648
        %v716 = vsel %vm633, %v715, %v714
        %v717 = vsub.s32 4, %v693
        %v718 = vsel %vm633, %v717, %v693
        %v719 = vsel %vm632, %v622, %v716
        %v720 = vsel %vm632, 0, %v718
        %v721 = vcosq.f32.pop %v719
        %v722 = vsinq.f32.pop %v719
        %vm723 = vweird.f32 %v622
        %v724 = vadd.s32 %v720, 3
        %v725 = vand.u32 %v724, 3
        %vm726 = vcmp.lt.s32.totalorder %v725, 2
        %vm727 = vcmp.eq.s32.totalorder %v725, 0
        %v728 = vxor.u32 %v722, 2147483648
        %v729 = vsel %vm727, %v721, %v728
        %vm730 = vcmp.eq.s32.totalorder %v725, 2
        %v731 = vxor.u32 %v721, 2147483648
        %v732 = vsel %vm730, %v731, %v722
        %v733 = vsel %vm726, %v729, %v732
        %v734 = vsel %vm723, nan, %v733
        %736 = vset.pattern.permute.xlu0 0
        %737 = vperm.xlu0 %736, %v624
        %v738 = vpop.permute.xlu0 %737
        %v740 = vmul.f32 %v734, %v738
        %v741 = vand.u32 2147483647, %v622
        %vm742 = vcmp.le.f32.partialorder %v741, 0.7853982
        %vm743 = vcmp.lt.s32.totalorder %v622, 0
        %v744 = vand.u32 %v622, 2139095040
        %v745 = vshrl.u32 %v744, 23
        %v746 = vsub.s32 %v745, 127
        %v747 = vand.u32 2147483647, %v622
        %v748 = vand.u32 %v747, 8388607
        %v749 = vor.u32 %v748, 8388608
        %v750 = vsub.s32 0, %v749
        %v751 = vadd.s32 %v746, 1
        %vm752 = vcmp.gt.s32.totalorder %v751, 0
        %v753 = vsel %vm752, %v751, 0
        %v754 = vshrl.u32 %v753, 5
        %v755 = vand.u32 %v753, 31
        %v756 = vsub.s32 32, %v755
        %v757 = vshrl.u32 683565275, %v756
        %v758 = vshll.u32 683565275, %v755
        %v759 = vshrl.u32 2475754826, %v756
        %v760 = vor.u32 %v758, %v759
        %v761 = vshll.u32 2475754826, %v755
        %v762 = vshrl.u32 2131351028, %v756
        %v763 = vor.u32 %v761, %v762
        %v764 = vshll.u32 2131351028, %v755
        %v765 = vshrl.u32 2102212464, %v756
        %v766 = vor.u32 %v764, %v765
        %v767 = vshll.u32 2102212464, %v755
        %v768 = vshrl.u32 920167782, %v756
        %v769 = vor.u32 %v767, %v768
        %v770 = vshll.u32 920167782, %v755
        %v771 = vshrl.u32 1326507024, %v756
        %v772 = vor.u32 %v770, %v771
        %vm773 = vcmp.lt.s32.totalorder %v754, 1
        %vm774 = vcmp.lt.s32.totalorder %v754, 2
        %vm775 = vcmp.lt.s32.totalorder %v754, 3
        %vm776 = vcmp.lt.s32.totalorder %v754, 4
        %v777 = vsel %vm773, %v757, %v760
        %v778 = vsel %vm776, %v766, 2102212464
        %v779 = vsel %vm775, %v763, %v778
        %v780 = vsel %vm774, %v777, %v779
        %v781 = vsel %vm773, %v760, %v763
        %v782 = vsel %vm776, %v769, 920167782
        %v783 = vsel %vm775, %v766, %v782
        %v784 = vsel %vm774, %v781, %v783
        %v785 = vsel %vm773, %v763, %v766
        %v786 = vsel %vm776, %v772, 1326507024
        %v787 = vsel %vm775, %v769, %v786
        %v788 = vsel %vm774, %v785, %v787
        %v789 = vshll.u32 %v749, 8
        %v790 = vmul.u32.u64.compose %v789, %v788
        %v791 = vextract.low.u32 %v790
        %v792 = vextract.high.u32 %v790
        %v793 = vmul.u32.u64.compose %v789, %v784
        %v794 = vextract.low.u32 %v793
        %v795 = vextract.high.u32 %v793
        %v796 = vmul.u32 %v789, %v780
        %v797 = vadd.s32 %v792, %v794
        %vm798 = vc.u32 %v792, %v794
        %v799 = vadd.s32 %v795, 1
        %v800 = vsel %vm798, %v799, %v795
        %v801 = vadd.s32 %v796, %v800
        %v802 = vadd.s32 %v801, 536870912
        %v803 = vshrl.u32 %v802, 30
        %v804 = vshll.u32 %v803, 30
        %v805 = vsub.s32 %v801, %v804
        %vm806 = vcmp.lt.s32.totalorder %v805, 0
        %v807 = vsub.s32 0, %v805
        %v808 = vsel %vm806, %v807, %v805
        %v809 = vclz %v808
        %v810 = vsub.s32 %v809, 2
        %vm811 = vcmp.gt.s32.totalorder 0, %v810
        %v812 = vsel %vm811, 0, %v810
        %v813 = vsub.s32 32, %v812
        %v814 = vshll.u32 %v805, %v812
        %v815 = vshrl.u32 %v797, %v813
        %v816 = vor.u32 %v814, %v815
        %v817 = vsub.s32 4294967266, %v812
        %v818 = vadd.s32 %v817, 127
        %v819 = vshll.u32 %v818, 23
        %v820 = vor.u32 4788187, %v819
        %v821 = vand.u32 2147483647, %v820
        %v823 = vcvt.s32.f32 %v816
        %v824 = vmul.f32 %v823, %v821
        %v825 = vxor.u32 %v824, 2147483648
        %v826 = vsel %vm743, %v825, %v824
        %v827 = vsub.s32 4, %v803
        %v828 = vsel %vm743, %v827, %v803
        %v829 = vsel %vm742, %v622, %v826
        %v830 = vsel %vm742, 0, %v828
        %v831 = vcosq.f32.pop %v829
        %v832 = vsinq.f32.pop %v829
        %vm833 = vweird.f32 %v622
        %v834 = vand.u32 %v830, 3
        %vm835 = vcmp.lt.s32.totalorder %v834, 2
        %vm836 = vcmp.eq.s32.totalorder %v834, 0
        %v837 = vxor.u32 %v832, 2147483648
        %v838 = vsel %vm836, %v831, %v837
        %vm839 = vcmp.eq.s32.totalorder %v834, 2
        %v840 = vxor.u32 %v831, 2147483648
        %v841 = vsel %vm839, %v840, %v832
        %v842 = vsel %vm835, %v838, %v841
        %v843 = vsel %vm833, nan, %v842
        %845 = vset.pattern.permute.xlu0 0
        %846 = vperm.xlu0 %845, %v626
        %v847 = vpop.permute.xlu0 %846
        %v849 = vmul.f32 %v843, %v847
        %v850 = vadd.f32 %v740, %v849
        %v851 = vrot.slane %v850, 7
        %853 = vset.pattern.permute.xlu0 0
        %854 = vperm.xlu0 %853, %v628
        %v855 = vpop.permute.xlu0 %854
        %v857 = vmul.f32 %v850, %v855
        %859 = vset.pattern.permute.xlu0 0
        %860 = vperm.xlu0 %859, %v630
        %v861 = vpop.permute.xlu0 %860
        %v863 = vmul.f32 %v851, %v861
        %v864 = vadd.f32 %v857, %v863
        %865 = vst [vmem:[%s134] sm:$0xff] %v864
        %s866 = sand.u32 %s71, 1
        %s867 = scalar_lea.sflag [#allocation3], %s866
        %s868 = sand.u32 %s71, 1
        %s869 = smul.addr %s868, 8
        %s870 = scalar_lea.vmem [#allocation2], %s869
        // Predicated region
        $region29: #{tpu_custom_call.1} parent=27 // pred_check
          %p871 = pneg %p81
        $region30: #{tpu_custom_call.1} parent=27 // pred_check_branch
          %873 = sbr.rel (%p871) target = $region32
        $region31: #{tpu_custom_call.1} parent=27 // pred_region
          %s875 = ssub.s32 128, 128
          %876 = vsyncadd %s867, %s875
          %s877 = smul.addr %s16, 128
          %s878 = scalar_lea.hbm %s2, %s877
          %s880 = sshll.u32 %s870, 4
          %s881 = int_to_ptr.vmem [resolvable:$true] %s880
          %883 = dma.vmem_to_hbm [thread:$0]  %s881, 128, %s878, %s867
        $region32: #{tpu_custom_call.1} parent=27 // pred_fallthru
          _
      $region28: #{tpu_custom_call.1} parent=5 // pred_fallthru
        _
      %p884 = scmp.le.s32.totalorder 2, %s11
      // Predicated region
      $region33: #{tpu_custom_call.1} parent=5 // pred_check
        %p885 = pneg %p884
      $region34: #{tpu_custom_call.1} parent=5 // pred_check_branch
        %887 = sbr.rel (%p885) target = $region36
      $region35: #{tpu_custom_call.1} parent=5 // pred_region
        %s888 = ssub.s32 %s11, 2
        // Predicated region
        $region37: #{tpu_custom_call.1} parent=35 // pred_check
          %p889 = pneg %p87
        $region38: #{tpu_custom_call.1} parent=35 // pred_check_branch
          %891 = sbr.rel (%p889) target = $region40
        $region39: #{tpu_custom_call.1} parent=35 // pred_region
          %s892 = sand.u32 %s72, 1
          %s893 = scalar_lea.sflag [#allocation3], %s892
          %s894 = sand.u32 %s72, 1
          %s895 = smul.addr %s894, 8
          %s896 = scalar_lea.vmem [#allocation2], %s895
          %897 = dma.done %s893, 128
        $region40: #{tpu_custom_call.1} parent=35 // pred_fallthru
          _
      $region36: #{tpu_custom_call.1} parent=5 // pred_fallthru
        _
    $region6: #{tpu_custom_call.1} parent=1 // loop_footer
      %s15 = sadd.s32 1, %s11
    $region7: #{tpu_custom_call.1} parent=1 // loop_footer_branch
      %10 = sbr.rel target = $region3
    $region8: #{tpu_custom_call.1} parent=1 // loop_exit
      _
    %898 = vsyncpa [#allocation3], 1
    %s899 = scalar_lea.sflag [#allocation3], 1
    %900 = vsyncpa %s899, 1

</llo_original>
